<compile_context>
chip_gen: v7x
topology: tpu7x:2x2x1
jax: 0.10.0
libtpu: 0.0.40
codegen_flags: <defaults>
</compile_context>

<pallas_src>
import numpy as np
import jax
import jax.numpy as jnp
from jax.experimental import pallas as pl
from jax.experimental.pallas import tpu as pltpu


TARGET_BLOCK_BYTES = 4 << 20   # ~4 MiB per x/out block (safe on v5e/v6e/v7x)
VMEM_LIMIT_BYTES = 32 << 20    # explicit scoped-VMEM limit (fits v7x's 64 MiB)
MAX_BATCH_TILE = 8             # cap static unroll of per-batch MXU matmuls


def build_inhi_mat(out_channels: int) -> np.ndarray:
    """Exact replica of the PyTorch __init__ inhibition-matrix construction."""
    inhi_range = out_channels // 8 + 1
    inhi = np.zeros((out_channels, out_channels), dtype=np.float32)
    for i in range(out_channels):
        j_min = (i - inhi_range // 2 + out_channels) % out_channels
        j_max = (i + inhi_range // 2) % out_channels
        if j_min < j_max:
            for j in range(j_min, j_max + 1):
                inhi[i, j] = 1.0
        else:
            for j in range(0, j_max + 1):
                inhi[i, j] = 1.0
            for j in range(j_min, out_channels):
                inhi[i, j] = 1.0
    return inhi


def make_lrn_kernel(tb: int):
    """Kernel over one (tb, C, THW) block. inhi_ref is pre-scaled by 0.001/range."""

    def lrn_kernel(x_ref, inhi_ref, o_ref):
        inhi = inhi_ref[...]                       # (C, C), already * scale
        # Static unroll over the (small) batch tile: one 2-D MXU matmul each.
        for b in range(tb):
            xb = x_ref[b]                          # (C, THW)
            y = jnp.dot(inhi, xb * xb,
                        preferred_element_type=jnp.float32) + 1.0
            # y >= 1.0, so exp(-0.75*log(y)) is safe; divide folded into the
            # negative exponent -> 2 EUP ops + 1 VPU mul per element.
            o_ref[b] = (xb * jnp.exp(-0.75 * jnp.log(y))).astype(o_ref.dtype)

    return lrn_kernel


def _choose_tiles(B, C_pad, HW_pad, dtype_bytes, target_bytes):
    """Pick (batch_tile, hw_tile) so one block is ~target_bytes.

    Keeps >= 2 grid steps when B >= 2 (so both TensorCores get work on v7x),
    keeps hw_tile a multiple of 128 that divides HW_pad, and caps the batch
    tile so the in-kernel unroll stays small.
    """
    per_batch = C_pad * HW_pad * dtype_bytes
    if per_batch <= target_bytes:
        # Grow the batch tile (must divide B evenly).
        tb = 1
        for cand in range(1, min(B, MAX_BATCH_TILE) + 1):
            if B % cand:
                continue
            if cand * per_batch > target_bytes:
                continue
            if B >= 2 and (B // cand) < 2:
                continue
            tb = cand
        return tb, HW_pad
    # One batch element is already big: tile the HW (lane) dimension instead.
    n_lane_blocks = HW_pad // 128
    thw_blocks = max(1, min(n_lane_blocks,
                            target_bytes // (C_pad * 128 * dtype_bytes)))
    while n_lane_blocks % thw_blocks:
        thw_blocks -= 1
    return 1, thw_blocks * 128


def lrn_forward(x: jax.Array, inhi_mat: jax.Array, inhi_range: int) -> jax.Array:
    """x: (B, C, H, W) float32. Returns (B, C, H, W)."""
    B, C, H, W = x.shape
    HW = H * W

    # Pad channels to a multiple of 8 (sublane) and HW to a multiple of 128
    # (lane) so stores are unmasked vst and tiling is (8,128)-clean.
    C_pad = ((C + 7) // 8) * 8
    HW_pad = ((HW + 127) // 128) * 128

    x_flat = x.reshape(B, C, HW)
    if C_pad != C or HW_pad != HW:
        x_flat = jnp.pad(x_flat, ((0, 0), (0, C_pad - C), (0, HW_pad - HW)))

    # Fold the 0.001 / inhi_range scale into the (small) host-side matrix.
    scale = 0.001 / float(inhi_range)
    inhi_scaled = inhi_mat.astype(jnp.float32) * scale
    if C_pad != C:
        inhi_scaled = jnp.pad(inhi_scaled, ((0, C_pad - C), (0, C_pad - C)))

    tb, thw = _choose_tiles(B, C_pad, HW_pad, 4, TARGET_BLOCK_BYTES)
    grid = (B // tb, HW_pad // thw)

    out_flat = pl.pallas_call(
        make_lrn_kernel(tb),
        out_shape=jax.ShapeDtypeStruct((B, C_pad, HW_pad), x.dtype),
        grid_spec=pltpu.PrefetchScalarGridSpec(
            num_scalar_prefetch=0,
            grid=grid,
            in_specs=[
                pl.BlockSpec((tb, C_pad, thw), lambda b, h: (b, 0, h)),
                pl.BlockSpec((C_pad, C_pad), lambda b, h: (0, 0)),
            ],
            out_specs=pl.BlockSpec((tb, C_pad, thw), lambda b, h: (b, 0, h)),
        ),
        compiler_params=pltpu.CompilerParams(
            dimension_semantics=("parallel", "parallel"),
            vmem_limit_bytes=VMEM_LIMIT_BYTES,
        ),
    )(x_flat, inhi_scaled)

    if C_pad != C or HW_pad != HW:
        out_flat = out_flat[:, :C, :HW]
    return out_flat.reshape(B, C, H, W)


def lrn_reference(x: jax.Array, inhi_mat: jax.Array, inhi_range: int) -> jax.Array:
    B, C, H, W = x.shape
    y = (x ** 2).reshape(B, C, H * W)
    y = jnp.einsum("ij,bjk->bik", inhi_mat, y)
    y = y.reshape(B, C, H, W)
    y = y * 0.001 / inhi_range + 1.0
    y = y ** 0.75
    return x / y


if __name__ == "__main__":
    # Small shapes consistent with the module: batch=2, channels=16, spatial=16.
    B, C, H, W = 2, 16, 16, 16
    inhi_range = C // 8 + 1

    key = jax.random.PRNGKey(0)
    x = jax.random.normal(key, (B, C, H, W), dtype=jnp.float32)

    inhi_mat = jnp.asarray(build_inhi_mat(C))

    out = lrn_forward(x, inhi_mat, inhi_range)
    out = jax.block_until_ready(out)

    ref = lrn_reference(x, inhi_mat, inhi_range)
    assert out.shape == (B, C, H, W)
    np.testing.assert_allclose(np.asarray(out), np.asarray(ref),
                               rtol=1e-5, atol=1e-5)

    print("KERNEL_OK")
</pallas_src>

<mosaic_0001>
module attributes {stable_mosaic.version = 11 : i64} {
  func.func @lrn_kernel(%arg0: i32, %arg1: i32, %arg2: memref<1x16x256xf32, #tpu.memory_space<vmem>>, %arg3: memref<16x16xf32, #tpu.memory_space<vmem>>, %arg4: memref<1x16x256xf32, #tpu.memory_space<vmem>>) attributes {dimension_semantics = [#tpu.dimension_semantics<parallel>, #tpu.dimension_semantics<parallel>], iteration_bounds = array<i64: 2, 1>, scalar_prefetch = 0 : i64, scratch_operands = 0 : i64, tpu.core_type = #tpu.core_type<tc>, window_params = [{transform_indices = @transform_0, window_bounds = array<i64: 1, 16, 256>}, {pipeline_mode = #tpu.pipeline_mode<synchronous>, transform_indices = @transform_1, window_bounds = array<i64: 16, 16>}, {transform_indices = @transform_2, window_bounds = array<i64: 1, 16, 256>}]} {
    %c0 = arith.constant 0 : index
    %c0_0 = arith.constant 0 : index
    %0 = vector.load %arg3[%c0, %c0_0] : memref<16x16xf32, #tpu.memory_space<vmem>>, vector<16x16xf32>
    %c0_1 = arith.constant 0 : index
    %c0_2 = arith.constant 0 : index
    %c0_3 = arith.constant 0 : index
    %1 = vector.load %arg2[%c0_1, %c0_2, %c0_3] : memref<1x16x256xf32, #tpu.memory_space<vmem>>, vector<1x16x256xf32>
    %2 = vector.shape_cast %1 : vector<1x16x256xf32> to vector<16x256xf32>
    %3 = arith.mulf %2, %2 : vector<16x256xf32>
    %cst = arith.constant dense<0.000000e+00> : vector<16x256xf32>
    %4 = tpu.matmul %0, %3, %cst {dimension_numbers = #tpu.dot_dimension_numbers<[1], [0], [0], [1], [0, 0, 1, 1], [], []>} : vector<16x16xf32>, vector<16x256xf32>, vector<16x256xf32> -> vector<16x256xf32>
    %cst_4 = arith.constant 1.000000e+00 : f32
    %5 = vector.broadcast %cst_4 : f32 to vector<16x256xf32>
    %6 = arith.addf %4, %5 : vector<16x256xf32>
    %7 = math.log %6 : vector<16x256xf32>
    %cst_5 = arith.constant -7.500000e-01 : f32
    %8 = vector.broadcast %cst_5 : f32 to vector<16x256xf32>
    %9 = arith.mulf %8, %7 : vector<16x256xf32>
    %10 = math.exp %9 : vector<16x256xf32>
    %11 = arith.mulf %2, %10 : vector<16x256xf32>
    %c0_6 = arith.constant 0 : index
    %c0_7 = arith.constant 0 : index
    %c0_8 = arith.constant 0 : index
    %12 = vector.load %arg4[%c0_6, %c0_7, %c0_8] : memref<1x16x256xf32, #tpu.memory_space<vmem>>, vector<1x16x256xf32>
    %13 = vector.shape_cast %12 : vector<1x16x256xf32> to vector<16x256xf32>
    %14 = vector.shape_cast %11 : vector<16x256xf32> to vector<1x16x256xf32>
    tpu.vector_store %arg4[%c0_6, %c0_7, %c0_8], %14 {strides = array<i32>} : memref<1x16x256xf32, #tpu.memory_space<vmem>>, vector<1x16x256xf32>,
    return
  }
  func.func @transform_0(%arg0: i32, %arg1: i32) -> (i32, i32, i32) {
    %c0_i32 = arith.constant 0 : i32
    %c0_i32_0 = arith.constant 0 : i32
    return %arg0, %c0_i32, %arg1 : i32, i32, i32
  }
  func.func @transform_1(%arg0: i32, %arg1: i32) -> (i32, i32) {
    %c0_i32 = arith.constant 0 : i32
    %c0_i32_0 = arith.constant 0 : i32
    %c0_i32_1 = arith.constant 0 : i32
    return %c0_i32, %c0_i32_0 : i32, i32
  }
  func.func @transform_2(%arg0: i32, %arg1: i32) -> (i32, i32, i32) {
    %c0_i32 = arith.constant 0 : i32
    %c0_i32_0 = arith.constant 0 : i32
    return %arg0, %c0_i32, %arg1 : i32, i32, i32
  }
}

</mosaic_0001>

<llo_original>
// kernel: tpu_custom_call.1
$region0: #{tpu_custom_call.1}
  #allocation0 [shape = 'u32[]', space=smem, size = 0x4, offset = 0x4, fixed_abs, tag = 'smem constant byte address 0x4 - core index']
  #allocation1 [shape = 'u32[144,128]{1,0:T(1,128)}', space=vmem, size = 0x12000, scoped, tag = 'internal scratch']
  %s0 = inlined_call_operand.hbm [shape: f32[2,16,256], index: 0, kind: input, shape index: {}]
  %s1 = inlined_call_operand.hbm [shape: f32[16,16], index: 1, kind: input, shape index: {}]
  %s2 = inlined_call_operand.hbm [shape: f32[2,16,256], index: 2, kind: output, shape index: {}]
  %s3 = sld [smem:[#allocation0]]
  $region49: #{tpu_custom_call.1} parent=0
    _
  %s5 = ssub.s32 1, %s3
  %s6 = scalar_select 0, %s5, %s3
  $region1: #{tpu_custom_call.1} parent=0
    #allocation2 [shape = 'u8[32768]{0}', space=vmem, size = 0x8000, scoped, tag = 'input window, operand 0']
    #allocation3 [shape = 's32[2]{0}', space=sflag, size = 0x8, scoped, tag = 'scoped memory for tpu_custom_call.1']
    #allocation4 [shape = 's32[2]{0}', space=sflag, size = 0x8, scoped, tag = 'scoped memory for tpu_custom_call.1']
    #allocation5 [shape = 'u8[8192]{0}', space=vmem, size = 0x2000, scoped, tag = 'input window, operand 1, single buffered']
    #allocation6 [shape = 's32[1]{0}', space=sflag, size = 0x4, scoped, tag = 'scoped memory for tpu_custom_call.1']
    #allocation7 [shape = 'u8[32768]{0}', space=vmem, size = 0x8000, scoped, tag = 'output window, operand 0']
    %7 = vsyncpa [#allocation3], 0
    %s8 = scalar_lea.sflag [#allocation3], 1
    %9 = vsyncpa %s8, 0
    %10 = vsyncpa [#allocation6], 0
    %11 = vsyncpa [#allocation4], 0
    %s12 = scalar_lea.sflag [#allocation4], 1
    %13 = vsyncpa %s12, 0
    loop: start=0, step=1, limit=4
    $region2: #{tpu_custom_call.1} parent=1 // loop_pre_header
      _
    $region3: #{tpu_custom_call.1} parent=1 // loop_header
      %s15 = sphi 0, %s19
      %p16 = scmp.ge.s32.totalorder %s15, 4
      %s22 = sphi 0, %s34
      %s23 = sphi 0, %s30
      %s24 = sphi 0, %s22
      %s25 = sphi 0, %s23
      %s26 = sphi 0, %s24
      %s27 = sphi 0, %s25
      %s39 = sphi 0, %s41
      %s42 = sphi 0, %s39
      %s43 = sphi 0, %s42
      %s59 = sphi 0, %s43
      %s63 = sphi 0, %s63
      %s65 = sphi 0, %s63
      %s66 = sphi 0, %s65
      %s80 = sphi 0, %s66
      %s88 = sphi 0, %s90
      %s91 = sphi 0, %s88
      %s92 = sphi 0, %s91
      %s108 = sphi 0, %s92
    $region4: #{tpu_custom_call.1} parent=1 // loop_header_branch
      %18 = sbr.rel (%p16) target = $region8
    $region5: #{tpu_custom_call.1} parent=1 // loop_body
      %s20 = ssub.s32 %s15, 1
      %s21 = ssub.s32 %s15, 2
      %s28 = sadd.s32 1, %s23
      %p29 = scmp.ge.s32.totalorder %s28, 1
      %s30 = scalar_select %p29, 0, %s28
      %s31 = sadd.s32 1, %s22
      %s32 = scalar_select %p29, %s31, %s22
      %p33 = scmp.ge.s32.totalorder %s32, 2
      %s34 = scalar_select %p33, 0, %s32
      %s35 = ssub.s32 %s22, %s34
      %s36 = ssub.s32 %s23, %s30
      %s37 = sor.u32 %s35, %s36
      %p38 = scmp.eq.s32.totalorder %s37, 0
      %s40 = sadd.s32 %s39, 1
      %s41 = scalar_select %p38, %s39, %s40
      %p44 = pneg %p38
      %p45 = scmp.eq.s32.totalorder %s15, 1
      %p46 = por %p44, %p45
      %p47 = scmp.ne.s32.totalorder %s39, %s42
      %p48 = scmp.eq.s32.totalorder %s15, 0
      %p49 = por %p47, %p48
      %p50 = scmp.ne.s32.totalorder %s39, %s42
      %p51 = scmp.eq.s32.totalorder %s20, 1
      %p52 = por %p50, %p51
      %p53 = scmp.ne.s32.totalorder %s42, %s43
      %p54 = scmp.eq.s32.totalorder %s20, 0
      %p55 = por %p53, %p54
      %p56 = scmp.ne.s32.totalorder %s42, %s43
      %p57 = scmp.eq.s32.totalorder %s21, 1
      %p58 = por %p56, %p57
      %p60 = scmp.ne.s32.totalorder %s43, %s59
      %p61 = scmp.eq.s32.totalorder %s21, 0
      %p62 = por %p60, %p61
      %s64 = sadd.s32 %s63, 1
      %p67 = scmp.eq.s32.totalorder %s15, 1
      %p68 = scmp.ne.s32.totalorder %s63, %s65
      %p69 = scmp.eq.s32.totalorder %s15, 0
      %p70 = por %p68, %p69
      %p71 = scmp.ne.s32.totalorder %s63, %s65
      %p72 = scmp.eq.s32.totalorder %s20, 1
      %p73 = por %p71, %p72
      %p74 = scmp.ne.s32.totalorder %s65, %s66
      %p75 = scmp.eq.s32.totalorder %s20, 0
      %p76 = por %p74, %p75
      %p77 = scmp.ne.s32.totalorder %s65, %s66
      %p78 = scmp.eq.s32.totalorder %s21, 1
      %p79 = por %p77, %p78
      %p81 = scmp.ne.s32.totalorder %s66, %s80
      %p82 = scmp.eq.s32.totalorder %s21, 0
      %p83 = por %p81, %p82
      %s84 = ssub.s32 %s22, %s34
      %s85 = ssub.s32 %s23, %s30
      %s86 = sor.u32 %s84, %s85
      %p87 = scmp.eq.s32.totalorder %s86, 0
      %s89 = sadd.s32 %s88, 1
      %s90 = scalar_select %p87, %s88, %s89
      %p93 = pneg %p87
      %p94 = scmp.eq.s32.totalorder %s15, 1
      %p95 = por %p93, %p94
      %p96 = scmp.ne.s32.totalorder %s88, %s91
      %p97 = scmp.eq.s32.totalorder %s15, 0
      %p98 = por %p96, %p97
      %p99 = scmp.ne.s32.totalorder %s88, %s91
      %p100 = scmp.eq.s32.totalorder %s20, 1
      %p101 = por %p99, %p100
      %p102 = scmp.ne.s32.totalorder %s91, %s92
      %p103 = scmp.eq.s32.totalorder %s20, 0
      %p104 = por %p102, %p103
      %p105 = scmp.ne.s32.totalorder %s91, %s92
      %p106 = scmp.eq.s32.totalorder %s21, 1
      %p107 = por %p105, %p106
      %p109 = scmp.ne.s32.totalorder %s92, %s108
      %p110 = scmp.eq.s32.totalorder %s21, 0
      %p111 = por %p109, %p110
      %p112 = scmp.le.s32.totalorder 1, %s15
      %p113 = scmp.lt.s32.totalorder %s15, 3
      %p114 = pnand %p112, %p113
      %p115 = pneg %p114
      // Predicated region
      $region9: #{tpu_custom_call.1} parent=5 // pred_check
        _
      $region10: #{tpu_custom_call.1} parent=5 // pred_check_branch
        %117 = sbr.rel (%p114) target = $region12
      $region11: #{tpu_custom_call.1} parent=5 // pred_region
        %s118 = ssub.s32 %s15, 1
        // Predicated region
        $region13: #{tpu_custom_call.1} parent=11 // pred_check
          %p119 = pneg %p76
        $region14: #{tpu_custom_call.1} parent=11 // pred_check_branch
          %121 = sbr.rel (%p119) target = $region16
        $region15: #{tpu_custom_call.1} parent=11 // pred_region
          %s123 = ssub.s32 256, 256
          %124 = vsyncadd [#allocation6], %s123
          %s125 = sshll.u32 [#allocation5], 4
          %s126 = int_to_ptr.vmem [resolvable:$true] %s125
          %131 = dma.hbm_to_vmem [thread:$0]  %s1, 256, %s126, [#allocation6], 128, 128, 8
        $region16: #{tpu_custom_call.1} parent=11 // pred_fallthru
          _
      $region12: #{tpu_custom_call.1} parent=5 // pred_fallthru
        _
      %p132 = scmp.lt.s32.totalorder %s15, 2
      // Predicated region
      $region17: #{tpu_custom_call.1} parent=5 // pred_check
        %p133 = pneg %p132
      $region18: #{tpu_custom_call.1} parent=5 // pred_check_branch
        %135 = sbr.rel (%p133) target = $region20
      $region19: #{tpu_custom_call.1} parent=5 // pred_region
        // Predicated region
        $region21: #{tpu_custom_call.1} parent=19 // pred_check
          %p136 = pneg %p49
        $region22: #{tpu_custom_call.1} parent=19 // pred_check_branch
          %138 = sbr.rel (%p136) target = $region24
        $region23: #{tpu_custom_call.1} parent=19 // pred_region
          %s139 = sand.u32 %s39, 1
          %s140 = scalar_lea.sflag [#allocation3], %s139
          %s141 = sand.u32 %s39, 1
          %s142 = smul.addr %s141, 32
          %s143 = scalar_lea.vmem [#allocation2], %s142
          %s144 = smul.u32 2, %s23
          %s146 = ssub.s32 512, 512
          %147 = vsyncadd %s140, %s146
          %s148 = smul.addr %s22, 4
          %s149 = sadd.s32 %s144, %s148
          %s150 = smul.addr %s149, 128
          %s151 = scalar_lea.hbm %s0, %s150
          %s152 = sshll.u32 %s143, 4
          %s153 = int_to_ptr.vmem [resolvable:$true] %s152
          %158 = dma.hbm_to_vmem [thread:$0]  %s151, 512, %s153, %s140, 256, 256, 16
        $region24: #{tpu_custom_call.1} parent=19 // pred_fallthru
          _
      $region20: #{tpu_custom_call.1} parent=5 // pred_fallthru
        _
      %p159 = scmp.le.s32.totalorder 1, %s15
      %p160 = scmp.lt.s32.totalorder %s15, 3
      %p161 = pnand %p159, %p160
      %p162 = pneg %p161
      // Predicated region
      $region25: #{tpu_custom_call.1} parent=5 // pred_check
        _
      $region26: #{tpu_custom_call.1} parent=5 // pred_check_branch
        %164 = sbr.rel (%p161) target = $region28
      $region27: #{tpu_custom_call.1} parent=5 // pred_region
        %s165 = ssub.s32 %s15, 1
        %s166 = sand.u32 %s42, 1
        %s167 = scalar_lea.sflag [#allocation3], %s166
        %s168 = sand.u32 %s42, 1
        %s169 = smul.addr %s168, 32
        %s170 = scalar_lea.vmem [#allocation2], %s169
        // Predicated region
        $region29: #{tpu_custom_call.1} parent=27 // pred_check
          %p171 = pneg %p55
        $region30: #{tpu_custom_call.1} parent=27 // pred_check_branch
          %173 = sbr.rel (%p171) target = $region32
        $region31: #{tpu_custom_call.1} parent=27 // pred_region
          %174 = dma.done %s167, 512
        $region32: #{tpu_custom_call.1} parent=27 // pred_fallthru
          _
        // Predicated region
        $region33: #{tpu_custom_call.1} parent=27 // pred_check
          %p175 = pneg %p76
        $region34: #{tpu_custom_call.1} parent=27 // pred_check_branch
          %177 = sbr.rel (%p175) target = $region36
        $region35: #{tpu_custom_call.1} parent=27 // pred_region
          %178 = dma.done [#allocation6], 256
        $region36: #{tpu_custom_call.1} parent=27 // pred_fallthru
          _
        %s179 = sand.u32 %s42, 1
        %s180 = scalar_lea.sflag [#allocation3], %s179
        %s181 = sand.u32 %s42, 1
        %s182 = smul.addr %s181, 32
        %s183 = scalar_lea.vmem [#allocation2], %s182
        %p184 = pneg %p55
        %p185 = pneg %p52
        %p186 = pneg %p76
        %p187 = pneg %p73
        %p188 = pneg %p104
        %p189 = pneg %p101
        %s190 = sand.u32 %s91, 1
        %s191 = scalar_lea.sflag [#allocation4], %s190
        %s192 = sand.u32 %s91, 1
        %s193 = smul.addr %s192, 32
        %s194 = scalar_lea.vmem [#allocation7], %s193
        %s195 = smul.u32 2, %s25
        %s196 = smul.u32 2, %s25
        %v197 = vld [vmem:[#allocation5] sm:$0xff]
        %v198 = vld [vmem:[#allocation5 + $0x8] sm:$0xff]
        %v199 = vld [vmem:[%s170] sm:$0xff]
        %v200 = vld [vmem:[%s170 + $0x8] sm:$0xff]
        %v201 = vld [vmem:[%s170 + $0x10] sm:$0xff]
        %v202 = vld [vmem:[%s170 + $0x18] sm:$0xff]
        %v203 = vmul.f32 %v199, %v199
        %v204 = vmul.f32 %v200, %v200
        %v205 = vmul.f32 %v201, %v201
        %v206 = vmul.f32 %v202, %v202
        %vm207 = vcmask 130048
        %v209 = vsel %vm207, %v197, 0
        %v212 = vsel %vm207, %v198, 0
        %214 = vmatprep.subr.mxu0 %v204
        %215 = vmatpush1.msra.mxu0 %v203
        %216 = vmatprep.subr.mxu0 %v206
        %217 = vmatpush1.msra.mxu0 %v205
        %218 = vmatprep.subr.mxu0 0.0
        %219 = vmatpush1.msra.mxu0 0.0
        %220 = vmatprep.subr.mxu0 0.0
        %221 = vmatpush1.msra.mxu0 0.0
        %222 = vmatprep.subr.mxu0 0.0
        %223 = vmatpush1.msra.mxu0 0.0
        %224 = vmatprep.subr.mxu0 0.0
        %225 = vmatpush1.msra.mxu0 0.0
        %226 = vmatprep.subr.mxu0 0.0
        %227 = vmatpush1.msra.mxu0 0.0
        %228 = vmatprep.subr.mxu0 0.0
        %229 = vmatpush1.msra.mxu0 0.0
        %230 = vmatprep.subr.mxu0 0.0
        %231 = vmatpush1.msra.mxu0 0.0
        %232 = vmatprep.subr.mxu0 0.0
        %233 = vmatpush1.msra.mxu0 0.0
        %234 = vmatprep.subr.mxu0 0.0
        %235 = vmatpush1.msra.mxu0 0.0
        %236 = vmatprep.subr.mxu0 0.0
        %237 = vmatpush1.msra.mxu0 0.0
        %238 = vmatprep.subr.mxu0 0.0
        %239 = vmatpush1.msra.mxu0 0.0
        %240 = vmatprep.subr.mxu0 0.0
        %241 = vmatpush1.msra.mxu0 0.0
        %242 = vmatprep.subr.mxu0 0.0
        %243 = vmatpush1.msra.mxu0 0.0
        %244 = vmatprep.subr.mxu0 0.0
        %245 = vmatpush1.msra.mxu0 0.0
        %246 = vmatprep.subr.mxu0 0.0
        %247 = vmatpush1.msra.mxu0 0.0
        %248 = vmatprep.subr.mxu0 0.0
        %249 = vmatpush1.msra.mxu0 0.0
        %250 = vmatprep.subr.mxu0 0.0
        %251 = vmatpush1.msra.mxu0 0.0
        %252 = vmatprep.subr.mxu0 0.0
        %253 = vmatpush1.msra.mxu0 0.0
        %254 = vmatprep.subr.mxu0 0.0
        %255 = vmatpush1.msra.mxu0 0.0
        %256 = vmatprep.subr.mxu0 0.0
        %257 = vmatpush1.msra.mxu0 0.0
        %258 = vmatprep.subr.mxu0 0.0
        %259 = vmatpush1.msra.mxu0 0.0
        %260 = vmatprep.subr.mxu0 0.0
        %261 = vmatpush1.msra.mxu0 0.0
        %262 = vmatprep.subr.mxu0 0.0
        %263 = vmatpush1.msra.mxu0 0.0
        %264 = vmatprep.subr.mxu0 0.0
        %265 = vmatpush1.msra.mxu0 0.0
        %266 = vmatprep.subr.mxu0 0.0
        %267 = vmatpush1.msra.mxu0 0.0
        %268 = vmatprep.subr.mxu0 0.0
        %269 = vmatpush1.msra.mxu0 0.0
        %270 = vmatprep.subr.mxu0 0.0
        %271 = vmatpush1.msra.mxu0 0.0
        %272 = vmatprep.subr.mxu0 0.0
        %273 = vmatpush1.msra.mxu0 0.0
        %274 = vmatprep.subr.mxu0 0.0
        %275 = vmatpush1.msra.mxu0 0.0
        %276 = vmatprep.subr.mxu0 0.0
        %277 = vmatpush1.msra.mxu0 0.0
        %278 = vmatprep.mubr.f32.mxu0 0.0
        %279 = vmatmul.mubr.f32.gmra.mrb[0].mxu0 %v209
        %v280 = vpop.f32.mrb[0].mxu0
        %v281 = vadd.f32 1.0, %v280
        %v282 = vpop.f32.mrb[0].mxu0
        %v283 = vadd.f32 1.0, %v282
        %284 = vmatprep.mubr.f32.mxu0 0.0
        %285 = vmatmul.mubr.f32.gmra.mrb[0].mxu0 %v212
        %v286 = vpop.f32.mrb[0].mxu0
        %v287 = vadd.f32 1.0, %v286
        %v288 = vpop.f32.mrb[0].mxu0
        %v289 = vadd.f32 1.0, %v288
        %290 = vdwg.mxu0
        %v291 = vlog2.pop %v281
        %v292 = vmul.f32 %v291, 0.6931472
        %v293 = vlog2.pop %v283
        %v294 = vmul.f32 %v293, 0.6931472
        %v295 = vlog2.pop %v287
        %v296 = vmul.f32 %v295, 0.6931472
        %v297 = vlog2.pop %v289
        %v298 = vmul.f32 %v297, 0.6931472
        %v299 = vmul.f32 %v292, -0.75
        %v300 = vmul.f32 %v294, -0.75
        %v301 = vmul.f32 %v296, -0.75
        %v302 = vmul.f32 %v298, -0.75
        %v303 = vmul.f32 %v299, 1.442695
        %v304 = vpow.pop %v303
        %v305 = vmul.f32 %v300, 1.442695
        %v306 = vpow.pop %v305
        %v307 = vmul.f32 %v301, 1.442695
        %v308 = vpow.pop %v307
        %v309 = vmul.f32 %v302, 1.442695
        %v310 = vpow.pop %v309
        %v311 = vmul.f32 %v199, %v304
        %v312 = vmul.f32 %v200, %v306
        %v313 = vmul.f32 %v201, %v308
        %v314 = vmul.f32 %v202, %v310
        %315 = vst [vmem:[%s194] sm:$0xff] %v311
        %316 = vst [vmem:[%s194 + $0x8] sm:$0xff] %v312
        %317 = vst [vmem:[%s194 + $0x10] sm:$0xff] %v313
        %318 = vst [vmem:[%s194 + $0x18] sm:$0xff] %v314
        %s319 = sand.u32 %s91, 1
        %s320 = scalar_lea.sflag [#allocation4], %s319
        %s321 = sand.u32 %s91, 1
        %s322 = smul.addr %s321, 32
        %s323 = scalar_lea.vmem [#allocation7], %s322
        // Predicated region
        $region37: #{tpu_custom_call.1} parent=27 // pred_check
          %p324 = pneg %p101
        $region38: #{tpu_custom_call.1} parent=27 // pred_check_branch
          %326 = sbr.rel (%p324) target = $region40
        $region39: #{tpu_custom_call.1} parent=27 // pred_region
          %s327 = smul.u32 2, %s25
          %s329 = ssub.s32 512, 512
          %330 = vsyncadd %s320, %s329
          %s331 = smul.addr %s24, 4
          %s332 = sadd.s32 %s327, %s331
          %s333 = smul.addr %s332, 128
          %s334 = scalar_lea.hbm %s2, %s333
          %s335 = sshll.u32 %s323, 4
          %s336 = int_to_ptr.vmem [resolvable:$true] %s335
          %341 = dma.vmem_to_hbm [thread:$0]  %s336, 512, %s334, %s320, 256, 256, 16
        $region40: #{tpu_custom_call.1} parent=27 // pred_fallthru
          _
      $region28: #{tpu_custom_call.1} parent=5 // pred_fallthru
        _
      %p342 = scmp.le.s32.totalorder 2, %s15
      // Predicated region
      $region41: #{tpu_custom_call.1} parent=5 // pred_check
        %p343 = pneg %p342
      $region42: #{tpu_custom_call.1} parent=5 // pred_check_branch
        %345 = sbr.rel (%p343) target = $region44
      $region43: #{tpu_custom_call.1} parent=5 // pred_region
        %s346 = ssub.s32 %s15, 2
        // Predicated region
        $region45: #{tpu_custom_call.1} parent=43 // pred_check
          %p347 = pneg %p107
        $region46: #{tpu_custom_call.1} parent=43 // pred_check_branch
          %349 = sbr.rel (%p347) target = $region48
        $region47: #{tpu_custom_call.1} parent=43 // pred_region
          %s350 = sand.u32 %s92, 1
          %s351 = scalar_lea.sflag [#allocation4], %s350
          %s352 = sand.u32 %s92, 1
          %s353 = smul.addr %s352, 32
          %s354 = scalar_lea.vmem [#allocation7], %s353
          %355 = dma.done %s351, 512
        $region48: #{tpu_custom_call.1} parent=43 // pred_fallthru
          _
      $region44: #{tpu_custom_call.1} parent=5 // pred_fallthru
        _
    $region6: #{tpu_custom_call.1} parent=1 // loop_footer
      %s19 = sadd.s32 1, %s15
    $region7: #{tpu_custom_call.1} parent=1 // loop_footer_branch
      %14 = sbr.rel target = $region3
    $region8: #{tpu_custom_call.1} parent=1 // loop_exit
      _
    %356 = vsyncpa [#allocation3], 1
    %s357 = scalar_lea.sflag [#allocation3], 1
    %358 = vsyncpa %s357, 1
    %359 = vsyncpa [#allocation6], 1
    %360 = vsyncpa [#allocation4], 1
    %s361 = scalar_lea.sflag [#allocation4], 1
    %362 = vsyncpa %s361, 1

</llo_original>
